<compile_context>
chip_gen: v6e
topology: v6e:2x2x1
jax: 0.10.0
libtpu: 0.0.40
codegen_flags: <defaults>
</compile_context>

<pallas_src>
import numpy as np
import jax
import jax.numpy as jnp
from jax.experimental import pallas as pl
from jax.experimental.pallas import tpu as pltpu


def _round_up(v, m):
    return (v + m - 1) // m * m


def _tpu_generation_params():
    """Returns (vmem_budget_bytes, vmem_limit_bytes, prefer_multi_step).

    v5e/v6e: 128 MiB VMEM, single TensorCore -> large blocks, single-pass grid OK.
    v7x    : 64 MiB VMEM, two TensorCores  -> conservative budget, prefer >= 2
             grid steps so both cores get work.
    """
    try:
        vmem_cap = int(pltpu.get_tpu_info().vmem_capacity_bytes)
    except Exception:
        vmem_cap = 64 * 1024 * 1024  # conservative fallback (v7x-sized VMEM)
    if vmem_cap >= 100 * 1024 * 1024:          # v5e / v6e
        return 64 * 1024 * 1024, 96 * 1024 * 1024, False
    else:                                       # v7x-like
        return 24 * 1024 * 1024, 48 * 1024 * 1024, True


def _pick_block_b(B, per_batch_bytes, vmem_budget_bytes, prefer_multi_step,
                  max_block_b=16):
    """Largest divisor of B that fits the VMEM budget (capped to bound the
    per-batch matmul unroll); on 2-TC chips prefer leaving >= 2 grid steps."""
    divisors = [d for d in range(1, B + 1) if B % d == 0 and d <= max_block_b]
    if not divisors:
        divisors = [1]
    fitting = [d for d in divisors
               if d * per_batch_bytes <= vmem_budget_bytes] or [min(divisors)]
    if prefer_multi_step:
        multi = [d for d in fitting if d < B]
        if multi:
            return max(multi)
    return max(fitting)


def _make_corr_kernel(block_b, Hz, Wz, Hx, Wx, Nx, Nxp, compute_dtype):
    taps = [(p, q) for p in range(Hz) for q in range(Wz)]

    def corr_kernel(z_ref, x_ref, o_ref, t_ref):
        # z_ref: (block_b, Hz*Wz, C)   template taps as matmul rows
        # x_ref: (block_b, C, Hx*Wx)   raw search features, channels = contraction
        # o_ref: (block_b, 1, Hx*Wx)   flat correlation surface (valid part is the
        #                              top-left (Ho, Wo) window of (Hx, Wx))
        # t_ref: (block_b, Hz*Wz, Nxp) VMEM scratch, lane-padded per-tap maps

        # Zero the scratch lane padding once (it is never overwritten, and only
        # feeds output lanes that the wrapper slices away).
        if Nxp > Nx:
            @pl.when(pl.program_id(0) == 0)
            def _zero_pad():
                t_ref[:, :, Nx:] = jnp.zeros(
                    (block_b, Hz * Wz, Nxp - Nx), jnp.float32)

        # MXU: per-tap correlation maps. M = Hz*Wz taps, K = C, N = Hx*Wx,
        # bf16 operands (configurable), f32 accumulation.
        z = z_ref[...].astype(compute_dtype)
        x = x_ref[...].astype(compute_dtype)
        t = jnp.einsum('btc,bcn->btn', z, x,
                       preferred_element_type=jnp.float32)
        t_ref[:, :, :Nx] = t

        # Shift-and-accumulate the per-tap maps: each tap's contribution to
        # output position n = i*Wx + j lives at column n + (p*Wx + q) of its
        # row, so a static-offset lane slice per tap + a VPU add suffices.
        acc = jnp.zeros((block_b, 1, Nx), jnp.float32)
        for (p, q) in taps:
            tap = p * Wz + q
            off = p * Wx + q
            acc = acc + t_ref[:, tap:tap + 1, off:off + Nx]

        # 0.1 scale applied once, in f32, on the small output tile.
        o_ref[...] = (0.1 * acc).astype(o_ref.dtype)

    return corr_kernel


def corr_up(z_f, x_f, *, compute_dtype=jnp.bfloat16, block_b=None):
    """Pallas equivalent of Corr_Up.forward(z_f, x_f) in training mode.

    z_f: (B, C, Hz, Wz)  template features
    x_f: (B, C, Hx, Wx)  search features
    returns: (B, 1, Ho, Wo), Ho = Hx - Hz + 1, Wo = Wx - Wz + 1 (dtype of x_f)
    """
    B, C, Hz, Wz = z_f.shape
    Bx, Cx, Hx, Wx = x_f.shape
    assert B == Bx and C == Cx
    assert Hz <= Hx and Wz <= Wx
    Ho, Wo = Hx - Hz + 1, Wx - Wz + 1
    T = Hz * Wz
    Nx = Hx * Wx
    # Lane-padded scratch width so every shifted per-tap window is a fixed-size
    # static slice. Padding exists only in the VMEM scratch, never in HBM.
    Nxp = _round_up(Nx + (Hz - 1) * Wx + (Wz - 1), 128)
    out_dtype = x_f.dtype

    # Wrapper-side layout plumbing only (no data blow-up): free reshapes plus a
    # tiny transpose of the template so taps form the matmul M dimension.
    z_in = jnp.swapaxes(z_f.reshape(B, C, T), 1, 2)     # (B, Hz*Wz, C)
    x_in = x_f.reshape(B, C, Nx)                        # (B, C, Hx*Wx) raw bytes

    # Per-batch VMEM footprint estimate (double-buffered I/O blocks + scratch +
    # einsum result / accumulator slack) for block sizing.
    in_item = np.dtype(z_f.dtype).itemsize
    per_batch_bytes = (
        2 * in_item * (T * C + C * Nx)     # double-buffered input blocks
        + 2 * 4 * Nx                       # double-buffered output block
        + 4 * T * Nxp                      # f32 per-tap scratch
        + 4 * (T * Nx + 2 * Nx))           # einsum result + accumulator slack
    vmem_budget, vmem_limit, prefer_multi = _tpu_generation_params()
    if block_b is None:
        block_b = _pick_block_b(B, per_batch_bytes, vmem_budget, prefer_multi)
    assert B % block_b == 0, "block_b must divide the batch size"

    kernel = _make_corr_kernel(block_b, Hz, Wz, Hx, Wx, Nx, Nxp, compute_dtype)

    out = pl.pallas_call(
        kernel,
        out_shape=jax.ShapeDtypeStruct((B, 1, Nx), out_dtype),
        grid_spec=pltpu.PrefetchScalarGridSpec(
            num_scalar_prefetch=0,
            grid=(B // block_b,),
            in_specs=[
                pl.BlockSpec((block_b, T, C), lambda b: (b, 0, 0)),
                pl.BlockSpec((block_b, C, Nx), lambda b: (b, 0, 0)),
            ],
            out_specs=pl.BlockSpec((block_b, 1, Nx), lambda b: (b, 0, 0)),
            scratch_shapes=[pltpu.VMEM((block_b, T, Nxp), jnp.float32)],
        ),
        compiler_params=pltpu.CompilerParams(
            dimension_semantics=("parallel",),
            vmem_limit_bytes=vmem_limit),
    )(z_in, x_in)

    # Keep only the valid correlation window of the flat (Hx, Wx) surface.
    return out[:, 0, :].reshape(B, Hx, Wx)[:, :Ho, :Wo].reshape(B, 1, Ho, Wo)


def corr_up_reference(z_f, x_f):
    """float64 numpy reference of the PyTorch grouped conv2d (training path)."""
    z = np.asarray(z_f, dtype=np.float64)
    x = np.asarray(x_f, dtype=np.float64)
    B, C, Hz, Wz = z.shape
    _, _, Hx, Wx = x.shape
    Ho, Wo = Hx - Hz + 1, Wx - Wz + 1
    out = np.zeros((B, 1, Ho, Wo), dtype=np.float64)
    for b in range(B):
        for i in range(Ho):
            for j in range(Wo):
                out[b, 0, i, j] = np.sum(x[b, :, i:i + Hz, j:j + Wz] * z[b])
    return 0.1 * out


if __name__ == "__main__":
    key = jax.random.PRNGKey(0)
    kz, kx = jax.random.split(key)

    B, C = 2, 4
    Hz = Wz = 8      # template feature map
    Hx = Wx = 16     # search feature map

    z_f = jax.random.normal(kz, (B, C, Hz, Wz), dtype=jnp.float32)
    x_f = jax.random.normal(kx, (B, C, Hx, Wx), dtype=jnp.float32)

    out = jax.jit(corr_up)(z_f, x_f)           # bf16 MXU operands, f32 accumulate
    out = np.asarray(jax.block_until_ready(out))

    # 1) Matched-precision check: same bf16 operand rounding, f64 accumulation.
    #    Validates the kernel's indexing / contraction exactly.
    z_bf = np.asarray(z_f.astype(jnp.bfloat16).astype(jnp.float32))
    x_bf = np.asarray(x_f.astype(jnp.bfloat16).astype(jnp.float32))
    ref_matched = corr_up_reference(z_bf, x_bf)
    np.testing.assert_allclose(out, ref_matched, rtol=1e-4, atol=1e-4)

    # 2) End-to-end check vs. the exact f32 module semantics
    #    (loose tolerance only covers the bf16 MXU operand rounding).
    ref_exact = corr_up_reference(z_f, x_f)
    np.testing.assert_allclose(out, ref_exact, rtol=5e-2, atol=5e-2)

    print("KERNEL_OK")
</pallas_src>

<mosaic_0001>
module attributes {stable_mosaic.version = 11 : i64} {
  func.func @corr_kernel(%arg0: i32, %arg1: memref<1x64x4xf32, #tpu.memory_space<vmem>>, %arg2: memref<1x4x256xf32, #tpu.memory_space<vmem>>, %arg3: memref<1x1x256xf32, #tpu.memory_space<vmem>>, %arg4: memref<1x64x384xf32, #tpu.memory_space<vmem>>) attributes {dimension_semantics = [#tpu.dimension_semantics<parallel>], iteration_bounds = array<i64: 2>, scalar_prefetch = 0 : i64, scratch_operands = 1 : i64, tpu.core_type = #tpu.core_type<tc>, window_params = [{transform_indices = @transform_0, window_bounds = array<i64: 1, 64, 4>}, {transform_indices = @transform_1, window_bounds = array<i64: 1, 4, 256>}, {transform_indices = @transform_2, window_bounds = array<i64: 1, 1, 256>}]} {
    %c0_i32 = arith.constant 0 : i32
    %0 = arith.cmpi eq, %arg0, %c0_i32 : i32
    %1 = arith.extui %0 : i1 to i32
    %c0_i32_0 = arith.constant 0 : i32
    %2 = arith.cmpi ne, %1, %c0_i32_0 : i32
    scf.if %2 {
      %cst_111 = arith.constant 0.000000e+00 : f32
      %141 = vector.broadcast %cst_111 : f32 to vector<1x64x128xf32>
      %c0_112 = arith.constant 0 : index
      %c0_113 = arith.constant 0 : index
      %c256 = arith.constant 256 : index
      %142 = vector.load %arg4[%c0_112, %c0_113, %c256] : memref<1x64x384xf32, #tpu.memory_space<vmem>>, vector<1x64x128xf32>
      tpu.vector_store %arg4[%c0_112, %c0_113, %c256], %141 {strides = array<i32>} : memref<1x64x384xf32, #tpu.memory_space<vmem>>, vector<1x64x128xf32>,
    } else {
    }
    %c0 = arith.constant 0 : index
    %c0_1 = arith.constant 0 : index
    %c0_2 = arith.constant 0 : index
    %3 = vector.load %arg1[%c0, %c0_1, %c0_2] : memref<1x64x4xf32, #tpu.memory_space<vmem>>, vector<1x64x4xf32>
    %4 = arith.truncf %3 : vector<1x64x4xf32> to vector<1x64x4xbf16>
    %c0_3 = arith.constant 0 : index
    %c0_4 = arith.constant 0 : index
    %c0_5 = arith.constant 0 : index
    %5 = vector.load %arg2[%c0_3, %c0_4, %c0_5] : memref<1x4x256xf32, #tpu.memory_space<vmem>>, vector<1x4x256xf32>
    %6 = arith.truncf %5 : vector<1x4x256xf32> to vector<1x4x256xbf16>
    "tpu.trace_start"() <{level = 10 : i32, message = "btc,bcn->btn"}> : () -> ()
    %cst = arith.constant dense<0.000000e+00> : vector<1x64x256xf32>
    %7 = tpu.matmul %4, %6, %cst {dimension_numbers = #tpu.dot_dimension_numbers<[2], [1], [1], [2], [0, 0, 0, 1, 1, 2], [0], [0]>} : vector<1x64x4xbf16>, vector<1x4x256xbf16>, vector<1x64x256xf32> -> vector<1x64x256xf32>
    "tpu.trace_stop"() : () -> ()
    %c0_6 = arith.constant 0 : index
    %c0_7 = arith.constant 0 : index
    %c0_8 = arith.constant 0 : index
    %8 = vector.load %arg4[%c0_6, %c0_7, %c0_8] : memref<1x64x384xf32, #tpu.memory_space<vmem>>, vector<1x64x256xf32>
    tpu.vector_store %arg4[%c0_6, %c0_7, %c0_8], %7 {strides = array<i32>} : memref<1x64x384xf32, #tpu.memory_space<vmem>>, vector<1x64x256xf32>,
    %cst_9 = arith.constant 0.000000e+00 : f32
    %9 = vector.broadcast %cst_9 : f32 to vector<1x1x256xf32>
    %c0_10 = arith.constant 0 : index
    %c0_11 = arith.constant 0 : index
    %c0_12 = arith.constant 0 : index
    %10 = vector.load %arg4[%c0_10, %c0_11, %c0_12] : memref<1x64x384xf32, #tpu.memory_space<vmem>>, vector<1x1x256xf32>
    %11 = arith.addf %9, %10 : vector<1x1x256xf32>
    %c0_13 = arith.constant 0 : index
    %c1 = arith.constant 1 : index
    %c1_14 = arith.constant 1 : index
    %12 = vector.load %arg4[%c0_13, %c1, %c1_14] : memref<1x64x384xf32, #tpu.memory_space<vmem>>, vector<1x1x256xf32>
    %13 = arith.addf %11, %12 : vector<1x1x256xf32>
    %c0_15 = arith.constant 0 : index
    %c2 = arith.constant 2 : index
    %c2_16 = arith.constant 2 : index
    %14 = vector.load %arg4[%c0_15, %c2, %c2_16] : memref<1x64x384xf32, #tpu.memory_space<vmem>>, vector<1x1x256xf32>
    %15 = arith.addf %13, %14 : vector<1x1x256xf32>
    %c0_17 = arith.constant 0 : index
    %c3 = arith.constant 3 : index
    %c3_18 = arith.constant 3 : index
    %16 = vector.load %arg4[%c0_17, %c3, %c3_18] : memref<1x64x384xf32, #tpu.memory_space<vmem>>, vector<1x1x256xf32>
    %17 = arith.addf %15, %16 : vector<1x1x256xf32>
    %c0_19 = arith.constant 0 : index
    %c4 = arith.constant 4 : index
    %c4_20 = arith.constant 4 : index
    %18 = vector.load %arg4[%c0_19, %c4, %c4_20] : memref<1x64x384xf32, #tpu.memory_space<vmem>>, vector<1x1x256xf32>
    %19 = arith.addf %17, %18 : vector<1x1x256xf32>
    %c0_21 = arith.constant 0 : index
    %c5 = arith.constant 5 : index
    %c5_22 = arith.constant 5 : index
    %20 = vector.load %arg4[%c0_21, %c5, %c5_22] : memref<1x64x384xf32, #tpu.memory_space<vmem>>, vector<1x1x256xf32>
    %21 = arith.addf %19, %20 : vector<1x1x256xf32>
    %c0_23 = arith.constant 0 : index
    %c6 = arith.constant 6 : index
    %c6_24 = arith.constant 6 : index
    %22 = vector.load %arg4[%c0_23, %c6, %c6_24] : memref<1x64x384xf32, #tpu.memory_space<vmem>>, vector<1x1x256xf32>
    %23 = arith.addf %21, %22 : vector<1x1x256xf32>
    %c0_25 = arith.constant 0 : index
    %c7 = arith.constant 7 : index
    %c7_26 = arith.constant 7 : index
    %24 = vector.load %arg4[%c0_25, %c7, %c7_26] : memref<1x64x384xf32, #tpu.memory_space<vmem>>, vector<1x1x256xf32>
    %25 = arith.addf %23, %24 : vector<1x1x256xf32>
    %c0_27 = arith.constant 0 : index
    %c8 = arith.constant 8 : index
    %c16 = arith.constant 16 : index
    %26 = vector.load %arg4[%c0_27, %c8, %c16] : memref<1x64x384xf32, #tpu.memory_space<vmem>>, vector<1x1x256xf32>
    %27 = arith.addf %25, %26 : vector<1x1x256xf32>
    %c0_28 = arith.constant 0 : index
    %c9 = arith.constant 9 : index
    %c17 = arith.constant 17 : index
    %28 = vector.load %arg4[%c0_28, %c9, %c17] : memref<1x64x384xf32, #tpu.memory_space<vmem>>, vector<1x1x256xf32>
    %29 = arith.addf %27, %28 : vector<1x1x256xf32>
    %c0_29 = arith.constant 0 : index
    %c10 = arith.constant 10 : index
    %c18 = arith.constant 18 : index
    %30 = vector.load %arg4[%c0_29, %c10, %c18] : memref<1x64x384xf32, #tpu.memory_space<vmem>>, vector<1x1x256xf32>
    %31 = arith.addf %29, %30 : vector<1x1x256xf32>
    %c0_30 = arith.constant 0 : index
    %c11 = arith.constant 11 : index
    %c19 = arith.constant 19 : index
    %32 = vector.load %arg4[%c0_30, %c11, %c19] : memref<1x64x384xf32, #tpu.memory_space<vmem>>, vector<1x1x256xf32>
    %33 = arith.addf %31, %32 : vector<1x1x256xf32>
    %c0_31 = arith.constant 0 : index
    %c12 = arith.constant 12 : index
    %c20 = arith.constant 20 : index
    %34 = vector.load %arg4[%c0_31, %c12, %c20] : memref<1x64x384xf32, #tpu.memory_space<vmem>>, vector<1x1x256xf32>
    %35 = arith.addf %33, %34 : vector<1x1x256xf32>
    %c0_32 = arith.constant 0 : index
    %c13 = arith.constant 13 : index
    %c21 = arith.constant 21 : index
    %36 = vector.load %arg4[%c0_32, %c13, %c21] : memref<1x64x384xf32, #tpu.memory_space<vmem>>, vector<1x1x256xf32>
    %37 = arith.addf %35, %36 : vector<1x1x256xf32>
    %c0_33 = arith.constant 0 : index
    %c14 = arith.constant 14 : index
    %c22 = arith.constant 22 : index
    %38 = vector.load %arg4[%c0_33, %c14, %c22] : memref<1x64x384xf32, #tpu.memory_space<vmem>>, vector<1x1x256xf32>
    %39 = arith.addf %37, %38 : vector<1x1x256xf32>
    %c0_34 = arith.constant 0 : index
    %c15 = arith.constant 15 : index
    %c23 = arith.constant 23 : index
    %40 = vector.load %arg4[%c0_34, %c15, %c23] : memref<1x64x384xf32, #tpu.memory_space<vmem>>, vector<1x1x256xf32>
    %41 = arith.addf %39, %40 : vector<1x1x256xf32>
    %c0_35 = arith.constant 0 : index
    %c16_36 = arith.constant 16 : index
    %c32 = arith.constant 32 : index
    %42 = vector.load %arg4[%c0_35, %c16_36, %c32] : memref<1x64x384xf32, #tpu.memory_space<vmem>>, vector<1x1x256xf32>
    %43 = arith.addf %41, %42 : vector<1x1x256xf32>
    %c0_37 = arith.constant 0 : index
    %c17_38 = arith.constant 17 : index
    %c33 = arith.constant 33 : index
    %44 = vector.load %arg4[%c0_37, %c17_38, %c33] : memref<1x64x384xf32, #tpu.memory_space<vmem>>, vector<1x1x256xf32>
    %45 = arith.addf %43, %44 : vector<1x1x256xf32>
    %c0_39 = arith.constant 0 : index
    %c18_40 = arith.constant 18 : index
    %c34 = arith.constant 34 : index
    %46 = vector.load %arg4[%c0_39, %c18_40, %c34] : memref<1x64x384xf32, #tpu.memory_space<vmem>>, vector<1x1x256xf32>
    %47 = arith.addf %45, %46 : vector<1x1x256xf32>
    %c0_41 = arith.constant 0 : index
    %c19_42 = arith.constant 19 : index
    %c35 = arith.constant 35 : index
    %48 = vector.load %arg4[%c0_41, %c19_42, %c35] : memref<1x64x384xf32, #tpu.memory_space<vmem>>, vector<1x1x256xf32>
    %49 = arith.addf %47, %48 : vector<1x1x256xf32>
    %c0_43 = arith.constant 0 : index
    %c20_44 = arith.constant 20 : index
    %c36 = arith.constant 36 : index
    %50 = vector.load %arg4[%c0_43, %c20_44, %c36] : memref<1x64x384xf32, #tpu.memory_space<vmem>>, vector<1x1x256xf32>
    %51 = arith.addf %49, %50 : vector<1x1x256xf32>
    %c0_45 = arith.constant 0 : index
    %c21_46 = arith.constant 21 : index
    %c37 = arith.constant 37 : index
    %52 = vector.load %arg4[%c0_45, %c21_46, %c37] : memref<1x64x384xf32, #tpu.memory_space<vmem>>, vector<1x1x256xf32>
    %53 = arith.addf %51, %52 : vector<1x1x256xf32>
    %c0_47 = arith.constant 0 : index
    %c22_48 = arith.constant 22 : index
    %c38 = arith.constant 38 : index
    %54 = vector.load %arg4[%c0_47, %c22_48, %c38] : memref<1x64x384xf32, #tpu.memory_space<vmem>>, vector<1x1x256xf32>
    %55 = arith.addf %53, %54 : vector<1x1x256xf32>
    %c0_49 = arith.constant 0 : index
    %c23_50 = arith.constant 23 : index
    %c39 = arith.constant 39 : index
    %56 = vector.load %arg4[%c0_49, %c23_50, %c39] : memref<1x64x384xf32, #tpu.memory_space<vmem>>, vector<1x1x256xf32>
    %57 = arith.addf %55, %56 : vector<1x1x256xf32>
    %c0_51 = arith.constant 0 : index
    %c24 = arith.constant 24 : index
    %c48 = arith.constant 48 : index
    %58 = vector.load %arg4[%c0_51, %c24, %c48] : memref<1x64x384xf32, #tpu.memory_space<vmem>>, vector<1x1x256xf32>
    %59 = arith.addf %57, %58 : vector<1x1x256xf32>
    %c0_52 = arith.constant 0 : index
    %c25 = arith.constant 25 : index
    %c49 = arith.constant 49 : index
    %60 = vector.load %arg4[%c0_52, %c25, %c49] : memref<1x64x384xf32, #tpu.memory_space<vmem>>, vector<1x1x256xf32>
    %61 = arith.addf %59, %60 : vector<1x1x256xf32>
    %c0_53 = arith.constant 0 : index
    %c26 = arith.constant 26 : index
    %c50 = arith.constant 50 : index
    %62 = vector.load %arg4[%c0_53, %c26, %c50] : memref<1x64x384xf32, #tpu.memory_space<vmem>>, vector<1x1x256xf32>
    %63 = arith.addf %61, %62 : vector<1x1x256xf32>
    %c0_54 = arith.constant 0 : index
    %c27 = arith.constant 27 : index
    %c51 = arith.constant 51 : index
    %64 = vector.load %arg4[%c0_54, %c27, %c51] : memref<1x64x384xf32, #tpu.memory_space<vmem>>, vector<1x1x256xf32>
    %65 = arith.addf %63, %64 : vector<1x1x256xf32>
    %c0_55 = arith.constant 0 : index
    %c28 = arith.constant 28 : index
    %c52 = arith.constant 52 : index
    %66 = vector.load %arg4[%c0_55, %c28, %c52] : memref<1x64x384xf32, #tpu.memory_space<vmem>>, vector<1x1x256xf32>
    %67 = arith.addf %65, %66 : vector<1x1x256xf32>
    %c0_56 = arith.constant 0 : index
    %c29 = arith.constant 29 : index
    %c53 = arith.constant 53 : index
    %68 = vector.load %arg4[%c0_56, %c29, %c53] : memref<1x64x384xf32, #tpu.memory_space<vmem>>, vector<1x1x256xf32>
    %69 = arith.addf %67, %68 : vector<1x1x256xf32>
    %c0_57 = arith.constant 0 : index
    %c30 = arith.constant 30 : index
    %c54 = arith.constant 54 : index
    %70 = vector.load %arg4[%c0_57, %c30, %c54] : memref<1x64x384xf32, #tpu.memory_space<vmem>>, vector<1x1x256xf32>
    %71 = arith.addf %69, %70 : vector<1x1x256xf32>
    %c0_58 = arith.constant 0 : index
    %c31 = arith.constant 31 : index
    %c55 = arith.constant 55 : index
    %72 = vector.load %arg4[%c0_58, %c31, %c55] : memref<1x64x384xf32, #tpu.memory_space<vmem>>, vector<1x1x256xf32>
    %73 = arith.addf %71, %72 : vector<1x1x256xf32>
    %c0_59 = arith.constant 0 : index
    %c32_60 = arith.constant 32 : index
    %c64 = arith.constant 64 : index
    %74 = vector.load %arg4[%c0_59, %c32_60, %c64] : memref<1x64x384xf32, #tpu.memory_space<vmem>>, vector<1x1x256xf32>
    %75 = arith.addf %73, %74 : vector<1x1x256xf32>
    %c0_61 = arith.constant 0 : index
    %c33_62 = arith.constant 33 : index
    %c65 = arith.constant 65 : index
    %76 = vector.load %arg4[%c0_61, %c33_62, %c65] : memref<1x64x384xf32, #tpu.memory_space<vmem>>, vector<1x1x256xf32>
    %77 = arith.addf %75, %76 : vector<1x1x256xf32>
    %c0_63 = arith.constant 0 : index
    %c34_64 = arith.constant 34 : index
    %c66 = arith.constant 66 : index
    %78 = vector.load %arg4[%c0_63, %c34_64, %c66] : memref<1x64x384xf32, #tpu.memory_space<vmem>>, vector<1x1x256xf32>
    %79 = arith.addf %77, %78 : vector<1x1x256xf32>
    %c0_65 = arith.constant 0 : index
    %c35_66 = arith.constant 35 : index
    %c67 = arith.constant 67 : index
    %80 = vector.load %arg4[%c0_65, %c35_66, %c67] : memref<1x64x384xf32, #tpu.memory_space<vmem>>, vector<1x1x256xf32>
    %81 = arith.addf %79, %80 : vector<1x1x256xf32>
    %c0_67 = arith.constant 0 : index
    %c36_68 = arith.constant 36 : index
    %c68 = arith.constant 68 : index
    %82 = vector.load %arg4[%c0_67, %c36_68, %c68] : memref<1x64x384xf32, #tpu.memory_space<vmem>>, vector<1x1x256xf32>
    %83 = arith.addf %81, %82 : vector<1x1x256xf32>
    %c0_69 = arith.constant 0 : index
    %c37_70 = arith.constant 37 : index
    %c69 = arith.constant 69 : index
    %84 = vector.load %arg4[%c0_69, %c37_70, %c69] : memref<1x64x384xf32, #tpu.memory_space<vmem>>, vector<1x1x256xf32>
    %85 = arith.addf %83, %84 : vector<1x1x256xf32>
    %c0_71 = arith.constant 0 : index
    %c38_72 = arith.constant 38 : index
    %c70 = arith.constant 70 : index
    %86 = vector.load %arg4[%c0_71, %c38_72, %c70] : memref<1x64x384xf32, #tpu.memory_space<vmem>>, vector<1x1x256xf32>
    %87 = arith.addf %85, %86 : vector<1x1x256xf32>
    %c0_73 = arith.constant 0 : index
    %c39_74 = arith.constant 39 : index
    %c71 = arith.constant 71 : index
    %88 = vector.load %arg4[%c0_73, %c39_74, %c71] : memref<1x64x384xf32, #tpu.memory_space<vmem>>, vector<1x1x256xf32>
    %89 = arith.addf %87, %88 : vector<1x1x256xf32>
    %c0_75 = arith.constant 0 : index
    %c40 = arith.constant 40 : index
    %c80 = arith.constant 80 : index
    %90 = vector.load %arg4[%c0_75, %c40, %c80] : memref<1x64x384xf32, #tpu.memory_space<vmem>>, vector<1x1x256xf32>
    %91 = arith.addf %89, %90 : vector<1x1x256xf32>
    %c0_76 = arith.constant 0 : index
    %c41 = arith.constant 41 : index
    %c81 = arith.constant 81 : index
    %92 = vector.load %arg4[%c0_76, %c41, %c81] : memref<1x64x384xf32, #tpu.memory_space<vmem>>, vector<1x1x256xf32>
    %93 = arith.addf %91, %92 : vector<1x1x256xf32>
    %c0_77 = arith.constant 0 : index
    %c42 = arith.constant 42 : index
    %c82 = arith.constant 82 : index
    %94 = vector.load %arg4[%c0_77, %c42, %c82] : memref<1x64x384xf32, #tpu.memory_space<vmem>>, vector<1x1x256xf32>
    %95 = arith.addf %93, %94 : vector<1x1x256xf32>
    %c0_78 = arith.constant 0 : index
    %c43 = arith.constant 43 : index
    %c83 = arith.constant 83 : index
    %96 = vector.load %arg4[%c0_78, %c43, %c83] : memref<1x64x384xf32, #tpu.memory_space<vmem>>, vector<1x1x256xf32>
    %97 = arith.addf %95, %96 : vector<1x1x256xf32>
    %c0_79 = arith.constant 0 : index
    %c44 = arith.constant 44 : index
    %c84 = arith.constant 84 : index
    %98 = vector.load %arg4[%c0_79, %c44, %c84] : memref<1x64x384xf32, #tpu.memory_space<vmem>>, vector<1x1x256xf32>
    %99 = arith.addf %97, %98 : vector<1x1x256xf32>
    %c0_80 = arith.constant 0 : index
    %c45 = arith.constant 45 : index
    %c85 = arith.constant 85 : index
    %100 = vector.load %arg4[%c0_80, %c45, %c85] : memref<1x64x384xf32, #tpu.memory_space<vmem>>, vector<1x1x256xf32>
    %101 = arith.addf %99, %100 : vector<1x1x256xf32>
    %c0_81 = arith.constant 0 : index
    %c46 = arith.constant 46 : index
    %c86 = arith.constant 86 : index
    %102 = vector.load %arg4[%c0_81, %c46, %c86] : memref<1x64x384xf32, #tpu.memory_space<vmem>>, vector<1x1x256xf32>
    %103 = arith.addf %101, %102 : vector<1x1x256xf32>
    %c0_82 = arith.constant 0 : index
    %c47 = arith.constant 47 : index
    %c87 = arith.constant 87 : index
    %104 = vector.load %arg4[%c0_82, %c47, %c87] : memref<1x64x384xf32, #tpu.memory_space<vmem>>, vector<1x1x256xf32>
    %105 = arith.addf %103, %104 : vector<1x1x256xf32>
    %c0_83 = arith.constant 0 : index
    %c48_84 = arith.constant 48 : index
    %c96 = arith.constant 96 : index
    %106 = vector.load %arg4[%c0_83, %c48_84, %c96] : memref<1x64x384xf32, #tpu.memory_space<vmem>>, vector<1x1x256xf32>
    %107 = arith.addf %105, %106 : vector<1x1x256xf32>
    %c0_85 = arith.constant 0 : index
    %c49_86 = arith.constant 49 : index
    %c97 = arith.constant 97 : index
    %108 = vector.load %arg4[%c0_85, %c49_86, %c97] : memref<1x64x384xf32, #tpu.memory_space<vmem>>, vector<1x1x256xf32>
    %109 = arith.addf %107, %108 : vector<1x1x256xf32>
    %c0_87 = arith.constant 0 : index
    %c50_88 = arith.constant 50 : index
    %c98 = arith.constant 98 : index
    %110 = vector.load %arg4[%c0_87, %c50_88, %c98] : memref<1x64x384xf32, #tpu.memory_space<vmem>>, vector<1x1x256xf32>
    %111 = arith.addf %109, %110 : vector<1x1x256xf32>
    %c0_89 = arith.constant 0 : index
    %c51_90 = arith.constant 51 : index
    %c99 = arith.constant 99 : index
    %112 = vector.load %arg4[%c0_89, %c51_90, %c99] : memref<1x64x384xf32, #tpu.memory_space<vmem>>, vector<1x1x256xf32>
    %113 = arith.addf %111, %112 : vector<1x1x256xf32>
    %c0_91 = arith.constant 0 : index
    %c52_92 = arith.constant 52 : index
    %c100 = arith.constant 100 : index
    %114 = vector.load %arg4[%c0_91, %c52_92, %c100] : memref<1x64x384xf32, #tpu.memory_space<vmem>>, vector<1x1x256xf32>
    %115 = arith.addf %113, %114 : vector<1x1x256xf32>
    %c0_93 = arith.constant 0 : index
    %c53_94 = arith.constant 53 : index
    %c101 = arith.constant 101 : index
    %116 = vector.load %arg4[%c0_93, %c53_94, %c101] : memref<1x64x384xf32, #tpu.memory_space<vmem>>, vector<1x1x256xf32>
    %117 = arith.addf %115, %116 : vector<1x1x256xf32>
    %c0_95 = arith.constant 0 : index
    %c54_96 = arith.constant 54 : index
    %c102 = arith.constant 102 : index
    %118 = vector.load %arg4[%c0_95, %c54_96, %c102] : memref<1x64x384xf32, #tpu.memory_space<vmem>>, vector<1x1x256xf32>
    %119 = arith.addf %117, %118 : vector<1x1x256xf32>
    %c0_97 = arith.constant 0 : index
    %c55_98 = arith.constant 55 : index
    %c103 = arith.constant 103 : index
    %120 = vector.load %arg4[%c0_97, %c55_98, %c103] : memref<1x64x384xf32, #tpu.memory_space<vmem>>, vector<1x1x256xf32>
    %121 = arith.addf %119, %120 : vector<1x1x256xf32>
    %c0_99 = arith.constant 0 : index
    %c56 = arith.constant 56 : index
    %c112 = arith.constant 112 : index
    %122 = vector.load %arg4[%c0_99, %c56, %c112] : memref<1x64x384xf32, #tpu.memory_space<vmem>>, vector<1x1x256xf32>
    %123 = arith.addf %121, %122 : vector<1x1x256xf32>
    %c0_100 = arith.constant 0 : index
    %c57 = arith.constant 57 : index
    %c113 = arith.constant 113 : index
    %124 = vector.load %arg4[%c0_100, %c57, %c113] : memref<1x64x384xf32, #tpu.memory_space<vmem>>, vector<1x1x256xf32>
    %125 = arith.addf %123, %124 : vector<1x1x256xf32>
    %c0_101 = arith.constant 0 : index
    %c58 = arith.constant 58 : index
    %c114 = arith.constant 114 : index
    %126 = vector.load %arg4[%c0_101, %c58, %c114] : memref<1x64x384xf32, #tpu.memory_space<vmem>>, vector<1x1x256xf32>
    %127 = arith.addf %125, %126 : vector<1x1x256xf32>
    %c0_102 = arith.constant 0 : index
    %c59 = arith.constant 59 : index
    %c115 = arith.constant 115 : index
    %128 = vector.load %arg4[%c0_102, %c59, %c115] : memref<1x64x384xf32, #tpu.memory_space<vmem>>, vector<1x1x256xf32>
    %129 = arith.addf %127, %128 : vector<1x1x256xf32>
    %c0_103 = arith.constant 0 : index
    %c60 = arith.constant 60 : index
    %c116 = arith.constant 116 : index
    %130 = vector.load %arg4[%c0_103, %c60, %c116] : memref<1x64x384xf32, #tpu.memory_space<vmem>>, vector<1x1x256xf32>
    %131 = arith.addf %129, %130 : vector<1x1x256xf32>
    %c0_104 = arith.constant 0 : index
    %c61 = arith.constant 61 : index
    %c117 = arith.constant 117 : index
    %132 = vector.load %arg4[%c0_104, %c61, %c117] : memref<1x64x384xf32, #tpu.memory_space<vmem>>, vector<1x1x256xf32>
    %133 = arith.addf %131, %132 : vector<1x1x256xf32>
    %c0_105 = arith.constant 0 : index
    %c62 = arith.constant 62 : index
    %c118 = arith.constant 118 : index
    %134 = vector.load %arg4[%c0_105, %c62, %c118] : memref<1x64x384xf32, #tpu.memory_space<vmem>>, vector<1x1x256xf32>
    %135 = arith.addf %133, %134 : vector<1x1x256xf32>
    %c0_106 = arith.constant 0 : index
    %c63 = arith.constant 63 : index
    %c119 = arith.constant 119 : index
    %136 = vector.load %arg4[%c0_106, %c63, %c119] : memref<1x64x384xf32, #tpu.memory_space<vmem>>, vector<1x1x256xf32>
    %137 = arith.addf %135, %136 : vector<1x1x256xf32>
    %cst_107 = arith.constant 1.000000e-01 : f32
    %138 = vector.broadcast %cst_107 : f32 to vector<1x1x256xf32>
    %139 = arith.mulf %138, %137 : vector<1x1x256xf32>
    %c0_108 = arith.constant 0 : index
    %c0_109 = arith.constant 0 : index
    %c0_110 = arith.constant 0 : index
    %140 = vector.load %arg3[%c0_108, %c0_109, %c0_110] : memref<1x1x256xf32, #tpu.memory_space<vmem>>, vector<1x1x256xf32>
    tpu.vector_store %arg3[%c0_108, %c0_109, %c0_110], %139 {strides = array<i32>} : memref<1x1x256xf32, #tpu.memory_space<vmem>>, vector<1x1x256xf32>,
    return
  }
  func.func @transform_0(%arg0: i32) -> (i32, i32, i32) {
    %c0_i32 = arith.constant 0 : i32
    %c0_i32_0 = arith.constant 0 : i32
    %c0_i32_1 = arith.constant 0 : i32
    return %arg0, %c0_i32, %c0_i32_0 : i32, i32, i32
  }
  func.func @transform_1(%arg0: i32) -> (i32, i32, i32) {
    %c0_i32 = arith.constant 0 : i32
    %c0_i32_0 = arith.constant 0 : i32
    %c0_i32_1 = arith.constant 0 : i32
    return %arg0, %c0_i32, %c0_i32_0 : i32, i32, i32
  }
  func.func @transform_2(%arg0: i32) -> (i32, i32, i32) {
    %c0_i32 = arith.constant 0 : i32
    %c0_i32_0 = arith.constant 0 : i32
    %c0_i32_1 = arith.constant 0 : i32
    return %arg0, %c0_i32, %c0_i32_0 : i32, i32, i32
  }
}

</mosaic_0001>

<llo_original>
// kernel: squeeze.1
$region0: #{squeeze.1}
  %s0 = inlined_call_operand.vmem [shape: f32[2,256], index: 0, kind: input, shape index: {}]
  %s1 = inlined_call_operand.vmem [shape: f32[2,16,16], index: 1, kind: output, shape index: {}]
  $region1: #{squeeze.1} parent=0
    #allocation0 [shape = 'u8[8192]{0}', space=vmem, size = 0x2000, scoped, tag = 'scoped mem for input reshape']
    %s3 = sshll.u32 1, 2
    %s4 = ssub.s32 %s3, 1
    %s5 = scalar_lea.vmem %s0, 2
    %v6 = vld [vmem:[%s5] sm:%s4]
    %s7 = scalar_lea.vmem [#allocation0], 8
    %8 = vst [vmem:[%s7] sm:%s4] %v6
    %v9 = vld [vmem:[%s0] sm:%s4]
    %10 = vst [vmem:[#allocation0] sm:%s4] %v9
    %v11 = vld [vmem:[#allocation0] sm:$0x3]
    %vm12 = vcmask 130048
    %13 = vst.msk [vmem:[%s1] ss:$16 sm:$0x3] %vm12, %v11
    %s14 = scalar_lea.vmem [#allocation0], 8
    %v15 = vld [vmem:[%s14] sm:$0x3]
    %vm16 = vcmask 130048
    %s17 = scalar_lea.vmem %s1, 8
    %18 = vst.msk [vmem:[%s17] ss:$16 sm:$0x3] %vm16, %v15
    %v19 = vld.sshfl [vmem:[#allocation0] sm:$0xff pattern:$0x99999180]
    %20 = vrot.lane.b32.xlu0 %v19, 112
    %v21 = vpop.permute.xlu0 %20
    %vm22 = vcmask 130048
    %s23 = scalar_lea.vmem %s1, 1
    %24 = vst.msk [vmem:[%s23] ss:$8 sm:$0xf] %vm22, %v21
    %v25 = vld.sshfl [vmem:[#allocation0] sm:$0xff pattern:$0x99999180]
    %26 = vrot.lane.b32.xlu0 %v25, 96
    %v27 = vpop.permute.xlu0 %26
    %vm28 = vcmask 130048
    %s29 = scalar_lea.vmem %s1, 2
    %30 = vst.msk [vmem:[%s29] ss:$8 sm:$0xf] %vm28, %v27
    %v31 = vld.sshfl [vmem:[#allocation0] sm:$0xff pattern:$0x99999180]
    %32 = vrot.lane.b32.xlu0 %v31, 80
    %v33 = vpop.permute.xlu0 %32
    %vm34 = vcmask 130048
    %s35 = scalar_lea.vmem %s1, 3
    %36 = vst.msk [vmem:[%s35] ss:$8 sm:$0xf] %vm34, %v33
    %v37 = vld.sshfl [vmem:[#allocation0] sm:$0xff pattern:$0x99999180]
    %38 = vrot.lane.b32.xlu0 %v37, 64
    %v39 = vpop.permute.xlu0 %38
    %vm40 = vcmask 130048
    %s41 = scalar_lea.vmem %s1, 4
    %42 = vst.msk [vmem:[%s41] ss:$8 sm:$0xf] %vm40, %v39
    %v43 = vld.sshfl [vmem:[#allocation0] sm:$0xff pattern:$0x99999180]
    %44 = vrot.lane.b32.xlu0 %v43, 48
    %v45 = vpop.permute.xlu0 %44
    %vm46 = vcmask 130048
    %s47 = scalar_lea.vmem %s1, 5
    %48 = vst.msk [vmem:[%s47] ss:$8 sm:$0xf] %vm46, %v45
    %v49 = vld.sshfl [vmem:[#allocation0] sm:$0xff pattern:$0x99999180]
    %50 = vrot.lane.b32.xlu0 %v49, 32
    %v51 = vpop.permute.xlu0 %50
    %vm52 = vcmask 130048
    %s53 = scalar_lea.vmem %s1, 6
    %54 = vst.msk [vmem:[%s53] ss:$8 sm:$0xf] %vm52, %v51
    %v55 = vld.sshfl [vmem:[#allocation0] sm:$0xff pattern:$0x99999180]
    %56 = vrot.lane.b32.xlu0 %v55, 16
    %v57 = vpop.permute.xlu0 %56
    %vm58 = vcmask 130048
    %s59 = scalar_lea.vmem %s1, 7
    %60 = vst.msk [vmem:[%s59] ss:$8 sm:$0xf] %vm58, %v57

// kernel: corr_up.1
$region0: #{corr_up.1}
  #allocation0 [shape = 'u32[]', space=smem, size = 0x4, offset = 0x4, fixed_abs, tag = 'smem constant byte address 0x4 - core index']
  #allocation1 [shape = 'u32[144,128]{1,0:T(1,128)}', space=vmem, size = 0x12000, scoped, tag = 'internal scratch']
  #allocation2 [shape = 'f32[1,64,384]{2,1,0:T(8,128)}', space=vmem, size = 0x18000, scoped, tag = 'scratch operand']
  %s0 = inlined_call_operand.vmem [shape: f32[2,64,4], index: 0, kind: input, shape index: {}]
  %s1 = inlined_call_operand.vmem [shape: f32[2,4,256], index: 1, kind: input, shape index: {}]
  %s2 = inlined_call_operand.vmem [shape: f32[2,1,256], index: 2, kind: output, shape index: {}]
  %s3 = sld [smem:[#allocation0]]
  $region45: #{corr_up.1} parent=0
    _
  %s5 = ssub.s32 1, %s3
  %s6 = scalar_select 0, %s5, %s3
  loop: start=0, step=1, limit=4
  $region2: #{corr_up.1} parent=0 // loop_pre_header
    _
  $region3: #{corr_up.1} parent=0 // loop_header
    %s8 = sphi 0, %s12
    %p9 = scmp.ge.s32.totalorder %s8, 4
    %s18 = sphi 0, %s20
    %s21 = sphi 0, %s18
    %s22 = sphi 0, %s21
    %s38 = sphi 0, %s22
    %s44 = sphi 0, %s46
    %s47 = sphi 0, %s44
    %s48 = sphi 0, %s47
    %s64 = sphi 0, %s48
    %s70 = sphi 0, %s72
    %s73 = sphi 0, %s70
    %s74 = sphi 0, %s73
    %s90 = sphi 0, %s74
  $region4: #{corr_up.1} parent=0 // loop_header_branch
    %11 = sbr.rel (%p9) target = $region8
  $region5: #{corr_up.1} parent=0 // loop_body
    %s13 = ssub.s32 %s8, 1
    %s14 = ssub.s32 %s8, 2
    %s15 = sadd.s32 %s8, 1
    %s16 = ssub.s32 %s8, %s15
    %p17 = scmp.eq.s32.totalorder %s16, 0
    %s19 = sadd.s32 %s18, 1
    %s20 = scalar_select %p17, %s18, %s19
    %p23 = pneg %p17
    %p24 = scmp.eq.s32.totalorder %s8, 1
    %p25 = por %p23, %p24
    %p26 = scmp.ne.s32.totalorder %s18, %s21
    %p27 = scmp.eq.s32.totalorder %s8, 0
    %p28 = por %p26, %p27
    %p29 = scmp.ne.s32.totalorder %s18, %s21
    %p30 = scmp.eq.s32.totalorder %s13, 1
    %p31 = por %p29, %p30
    %p32 = scmp.ne.s32.totalorder %s21, %s22
    %p33 = scmp.eq.s32.totalorder %s13, 0
    %p34 = por %p32, %p33
    %p35 = scmp.ne.s32.totalorder %s21, %s22
    %p36 = scmp.eq.s32.totalorder %s14, 1
    %p37 = por %p35, %p36
    %p39 = scmp.ne.s32.totalorder %s22, %s38
    %p40 = scmp.eq.s32.totalorder %s14, 0
    %p41 = por %p39, %p40
    %s42 = ssub.s32 %s8, %s15
    %p43 = scmp.eq.s32.totalorder %s42, 0
    %s45 = sadd.s32 %s44, 1
    %s46 = scalar_select %p43, %s44, %s45
    %p49 = pneg %p43
    %p50 = scmp.eq.s32.totalorder %s8, 1
    %p51 = por %p49, %p50
    %p52 = scmp.ne.s32.totalorder %s44, %s47
    %p53 = scmp.eq.s32.totalorder %s8, 0
    %p54 = por %p52, %p53
    %p55 = scmp.ne.s32.totalorder %s44, %s47
    %p56 = scmp.eq.s32.totalorder %s13, 1
    %p57 = por %p55, %p56
    %p58 = scmp.ne.s32.totalorder %s47, %s48
    %p59 = scmp.eq.s32.totalorder %s13, 0
    %p60 = por %p58, %p59
    %p61 = scmp.ne.s32.totalorder %s47, %s48
    %p62 = scmp.eq.s32.totalorder %s14, 1
    %p63 = por %p61, %p62
    %p65 = scmp.ne.s32.totalorder %s48, %s64
    %p66 = scmp.eq.s32.totalorder %s14, 0
    %p67 = por %p65, %p66
    %s68 = ssub.s32 %s8, %s15
    %p69 = scmp.eq.s32.totalorder %s68, 0
    %s71 = sadd.s32 %s70, 1
    %s72 = scalar_select %p69, %s70, %s71
    %p75 = pneg %p69
    %p76 = scmp.eq.s32.totalorder %s8, 1
    %p77 = por %p75, %p76
    %p78 = scmp.ne.s32.totalorder %s70, %s73
    %p79 = scmp.eq.s32.totalorder %s8, 0
    %p80 = por %p78, %p79
    %p81 = scmp.ne.s32.totalorder %s70, %s73
    %p82 = scmp.eq.s32.totalorder %s13, 1
    %p83 = por %p81, %p82
    %p84 = scmp.ne.s32.totalorder %s73, %s74
    %p85 = scmp.eq.s32.totalorder %s13, 0
    %p86 = por %p84, %p85
    %p87 = scmp.ne.s32.totalorder %s73, %s74
    %p88 = scmp.eq.s32.totalorder %s14, 1
    %p89 = por %p87, %p88
    %p91 = scmp.ne.s32.totalorder %s74, %s90
    %p92 = scmp.eq.s32.totalorder %s14, 0
    %p93 = por %p91, %p92
    %p94 = scmp.le.s32.totalorder 1, %s8
    %p95 = scmp.lt.s32.totalorder %s8, 3
    %p96 = pnand %p94, %p95
    %p97 = pneg %p96
    // Predicated region
    $region9: #{corr_up.1} parent=5 // pred_check
      _
    $region10: #{corr_up.1} parent=5 // pred_check_branch
      %99 = sbr.rel (%p96) target = $region12
    $region11: #{corr_up.1} parent=5 // pred_region
      %s100 = ssub.s32 %s8, 1
    $region12: #{corr_up.1} parent=5 // pred_fallthru
      _
    %p101 = scmp.lt.s32.totalorder %s8, 2
    // Predicated region
    $region13: #{corr_up.1} parent=5 // pred_check
      %p102 = pneg %p101
    $region14: #{corr_up.1} parent=5 // pred_check_branch
      %104 = sbr.rel (%p102) target = $region16
    $region15: #{corr_up.1} parent=5 // pred_region
      // Predicated region
      $region17: #{corr_up.1} parent=15 // pred_check
        %p105 = pneg %p28
      $region18: #{corr_up.1} parent=15 // pred_check_branch
        %107 = sbr.rel (%p105) target = $region20
      $region19: #{corr_up.1} parent=15 // pred_region
        %p108 = scmp.lt.s32.totalorder %s8, 1
        %s109 = scalar_select %p108, %s8, 1
        %s110 = smul.addr %s109, 8
        %s111 = smul.addr %s110, 8
        %s112 = scalar_lea.vmem %s0, %s111
      $region20: #{corr_up.1} parent=15 // pred_fallthru
        _
      // Predicated region
      $region21: #{corr_up.1} parent=15 // pred_check
        %p113 = pneg %p54
      $region22: #{corr_up.1} parent=15 // pred_check_branch
        %115 = sbr.rel (%p113) target = $region24
      $region23: #{corr_up.1} parent=15 // pred_region
        %p116 = scmp.lt.s32.totalorder %s8, 1
        %s117 = scalar_select %p116, %s8, 1
        %s118 = smul.addr %s117, 2
        %s119 = smul.addr %s118, 4
        %s120 = scalar_lea.vmem %s1, %s119
      $region24: #{corr_up.1} parent=15 // pred_fallthru
        _
    $region16: #{corr_up.1} parent=5 // pred_fallthru
      _
    %p121 = scmp.le.s32.totalorder 1, %s8
    %p122 = scmp.lt.s32.totalorder %s8, 3
    %p123 = pnand %p121, %p122
    %p124 = pneg %p123
    // Predicated region
    $region25: #{corr_up.1} parent=5 // pred_check
      _
    $region26: #{corr_up.1} parent=5 // pred_check_branch
      %126 = sbr.rel (%p123) target = $region28
    $region27: #{corr_up.1} parent=5 // pred_region
      %s127 = ssub.s32 %s8, 1
      %p128 = scmp.lt.s32.totalorder %s13, 1
      %s129 = scalar_select %p128, %s13, 1
      %s130 = smul.addr %s129, 8
      %s131 = smul.addr %s130, 8
      %s132 = scalar_lea.vmem %s0, %s131
      %p133 = pneg %p34
      %p134 = pneg %p31
      %p135 = scmp.lt.s32.totalorder %s13, 1
      %s136 = scalar_select %p135, %s13, 1
      %s137 = smul.addr %s136, 2
      %s138 = smul.addr %s137, 4
      %s139 = scalar_lea.vmem %s1, %s138
      %p140 = pneg %p60
      %p141 = pneg %p57
      %p142 = pneg %p86
      %p143 = pneg %p83
      %p144 = scmp.lt.s32.totalorder %s13, 1
      %s145 = scalar_select %p144, %s13, 1
      %s146 = smul.addr %s145, 2
      %s147 = scalar_lea.vmem %s2, %s146
      %p148 = scmp.lt.s32.totalorder %s13, 1
      %s149 = scalar_select %p148, %s13, 1
      %s150 = smul.addr %s149, 8
      %s151 = smul.addr %s150, 8
      %s152 = scalar_lea.vmem %s0, %s151
      %p153 = scmp.lt.s32.totalorder %s13, 1
      %s154 = scalar_select %p153, %s13, 1
      %s155 = smul.addr %s154, 2
      %s156 = smul.addr %s155, 4
      %s157 = scalar_lea.vmem %s1, %s156
      %p158 = scmp.lt.s32.totalorder %s13, 1
      %s159 = scalar_select %p158, %s13, 1
      %s160 = smul.addr %s159, 2
      %s161 = scalar_lea.vmem %s2, %s160
      %p163 = scmp.eq.s32.totalorder %s13, 0
      // Predicated region
      $region29: #{corr_up.1} parent=27 // pred_check
        %p164 = pneg %p163
      $region30: #{corr_up.1} parent=27 // pred_check_branch
        %166 = sbr.rel (%p164) target = $region32
      $region31: #{corr_up.1} parent=27 // pred_region
        %167 = vst [vmem:[#allocation2 + $0x10] sm:$0xff] 0.0
        %168 = vst [vmem:[#allocation2 + $0x28] sm:$0xff] 0.0
        %169 = vst [vmem:[#allocation2 + $0x40] sm:$0xff] 0.0
        %170 = vst [vmem:[#allocation2 + $0x58] sm:$0xff] 0.0
        %171 = vst [vmem:[#allocation2 + $0x70] sm:$0xff] 0.0
        %172 = vst [vmem:[#allocation2 + $0x88] sm:$0xff] 0.0
        %173 = vst [vmem:[#allocation2 + $0xa0] sm:$0xff] 0.0
        %174 = vst [vmem:[#allocation2 + $0xb8] sm:$0xff] 0.0
      $region32: #{corr_up.1} parent=27 // pred_fallthru
        _
      %v175 = vld [vmem:[%s152] sm:$0xff]
      %v176 = vld [vmem:[%s152 + $0x8] sm:$0xff]
      %v177 = vld [vmem:[%s152 + $0x10] sm:$0xff]
      %v178 = vld [vmem:[%s152 + $0x18] sm:$0xff]
      %v179 = vld [vmem:[%s152 + $0x20] sm:$0xff]
      %v180 = vld [vmem:[%s152 + $0x28] sm:$0xff]
      %v181 = vld [vmem:[%s152 + $0x30] sm:$0xff]
      %v182 = vld [vmem:[%s152 + $0x38] sm:$0xff]
      %v183 = vpack.c.bf16 %v176, %v175
      %v184 = vpack.c.bf16 %v178, %v177
      %v185 = vpack.c.bf16 %v180, %v179
      %v186 = vpack.c.bf16 %v182, %v181
      %v187 = vld [vmem:[%s157] sm:$0xff]
      %v189 = vcombine.high %v187, %v187
      %v191 = vpack.c.bf16 %v187, %v187
      %v192 = vpack.c.bf16 %v189, %v189
      %vm193 = vcmask 31744
      %v195 = vsel %vm193, %v183, 0
      %v198 = vsel %vm193, %v184, 0
      %v201 = vsel %vm193, %v185, 0
      %v204 = vsel %vm193, %v186, 0
      %vm206 = vcmask 1041408
      %v208 = vsel %vm206, %v191, 0
      %v211 = vsel %vm206, %v192, 0
      %213 = vmatprep.subr.bf16.mxu0 0
      %214 = vmatpush1.bf16.msra.mxu0 0
      %215 = vmatprep.subr.bf16.mxu0 0
      %216 = vmatpush1.bf16.msra.mxu0 0
      %217 = vmatprep.subr.bf16.mxu0 0
      %218 = vmatpush1.bf16.msra.mxu0 0
      %219 = vmatprep.subr.bf16.mxu0 0
      %220 = vmatpush1.bf16.msra.mxu0 0
      %221 = vmatprep.subr.bf16.mxu0 0
      %222 = vmatpush1.bf16.msra.mxu0 0
      %223 = vmatprep.subr.bf16.mxu0 0
      %224 = vmatpush1.bf16.msra.mxu0 0
      %225 = vmatprep.subr.bf16.mxu0 0
      %226 = vmatpush1.bf16.msra.mxu0 0
      %227 = vmatprep.subr.bf16.mxu0 %v211
      %228 = vmatpush1.bf16.msra.mxu0 %v208
      %229 = vmatprep.subr.bf16.mxu0 0
      %230 = vmatpush2.bf16.msra.mxu0 0
      %231 = vmatprep.subr.bf16.mxu0 0
      %232 = vmatpush2.bf16.msra.mxu0 0
      %233 = vmatprep.subr.bf16.mxu0 0
      %234 = vmatpush2.bf16.msra.mxu0 0
      %235 = vmatprep.subr.bf16.mxu0 0
      %236 = vmatpush2.bf16.msra.mxu0 0
      %237 = vmatprep.subr.bf16.mxu0 0
      %238 = vmatpush2.bf16.msra.mxu0 0
      %239 = vmatprep.subr.bf16.mxu0 0
      %240 = vmatpush2.bf16.msra.mxu0 0
      %241 = vmatprep.subr.bf16.mxu0 0
      %242 = vmatpush2.bf16.msra.mxu0 0
      %243 = vmatprep.subr.bf16.mxu0 0
      %244 = vmatpush2.bf16.msra.mxu0 0
      %245 = vmatprep.mubr.bf16.mxu0 0
      %246 = vmatmul.mubr.bf16.gmra.mxu0 %v195
      %v247 = vpop.f32.mrf.mxu0
      %v248 = vadd.f32 0.0, %v247
      %v249 = vpop.f32.mrf.mxu0
      %v250 = vadd.f32 0.0, %v249
      %v251 = vpop.f32.mrf.mxu0
      %v252 = vadd.f32 0.0, %v251
      %v253 = vpop.f32.mrf.mxu0
      %v254 = vadd.f32 0.0, %v253
      %255 = vmatprep.mubr.bf16.mxu0 0
      %256 = vmatmul.mubr.bf16.gmra.mxu0 %v198
      %v257 = vpop.f32.mrf.mxu0
      %v258 = vadd.f32 0.0, %v257
      %v259 = vpop.f32.mrf.mxu0
      %v260 = vadd.f32 0.0, %v259
      %v261 = vpop.f32.mrf.mxu0
      %v262 = vadd.f32 0.0, %v261
      %v263 = vpop.f32.mrf.mxu0
      %v264 = vadd.f32 0.0, %v263
      %265 = vmatprep.mubr.bf16.mxu0 0
      %266 = vmatmul.mubr.bf16.gmra.mxu0 %v201
      %v267 = vpop.f32.mrf.mxu0
      %v268 = vadd.f32 0.0, %v267
      %v269 = vpop.f32.mrf.mxu0
      %v270 = vadd.f32 0.0, %v269
      %v271 = vpop.f32.mrf.mxu0
      %v272 = vadd.f32 0.0, %v271
      %v273 = vpop.f32.mrf.mxu0
      %v274 = vadd.f32 0.0, %v273
      %275 = vmatprep.mubr.bf16.mxu0 0
      %276 = vmatmul.mubr.bf16.gmra.mxu0 %v204
      %v277 = vpop.f32.mrf.mxu0
      %v278 = vadd.f32 0.0, %v277
      %v279 = vpop.f32.mrf.mxu0
      %v280 = vadd.f32 0.0, %v279
      %v281 = vpop.f32.mrf.mxu0
      %v282 = vadd.f32 0.0, %v281
      %v283 = vpop.f32.mrf.mxu0
      %v284 = vadd.f32 0.0, %v283
      %285 = vdwg.mxu0
      %286 = vst [vmem:[#allocation2] sm:$0xff] %v248
      %287 = vst [vmem:[#allocation2 + $0x8] sm:$0xff] %v250
      %288 = vst [vmem:[#allocation2 + $0x18] sm:$0xff] %v252
      %289 = vst [vmem:[#allocation2 + $0x20] sm:$0xff] %v254
      %290 = vst [vmem:[#allocation2 + $0x30] sm:$0xff] %v258
      %291 = vst [vmem:[#allocation2 + $0x38] sm:$0xff] %v260
      %292 = vst [vmem:[#allocation2 + $0x48] sm:$0xff] %v262
      %293 = vst [vmem:[#allocation2 + $0x50] sm:$0xff] %v264
      %294 = vst [vmem:[#allocation2 + $0x60] sm:$0xff] %v268
      %295 = vst [vmem:[#allocation2 + $0x68] sm:$0xff] %v270
      %296 = vst [vmem:[#allocation2 + $0x78] sm:$0xff] %v272
      %297 = vst [vmem:[#allocation2 + $0x80] sm:$0xff] %v274
      %298 = vst [vmem:[#allocation2 + $0x90] sm:$0xff] %v278
      %299 = vst [vmem:[#allocation2 + $0x98] sm:$0xff] %v280
      %300 = vst [vmem:[#allocation2 + $0xa8] sm:$0xff] %v282
      %301 = vst [vmem:[#allocation2 + $0xb0] sm:$0xff] %v284
      %v302 = vld [vmem:[#allocation2] ss:$8 sm:$0x3]
      %v303 = vadd.f32 %v302, 0.0
      %s304 = scalar_lea.vmem [#allocation2], 1
      %v305 = vld [vmem:[%s304] ss:$8 sm:$0x7]
      %307 = vrot.lane.b32.xlu0 %v305, 127
      %v308 = vpop.permute.xlu0 %307
      %v309 = vrot.slane %v308, 1
      %vm310 = vcmask 1039360
      %v311 = vsel %vm310, %v308, %v309
      %v313 = vadd.f32 %v303, %v311
      %s314 = scalar_lea.vmem [#allocation2], 2
      %v315 = vld [vmem:[%s314] ss:$8 sm:$0x7]
      %317 = vrot.lane.b32.xlu0 %v315, 126
      %v318 = vpop.permute.xlu0 %317
      %v319 = vrot.slane %v318, 1
      %vm320 = vcmask 1031168
      %v321 = vsel %vm320, %v318, %v319
      %v323 = vadd.f32 %v313, %v321
      %s324 = scalar_lea.vmem [#allocation2], 3
      %v325 = vld [vmem:[%s324] ss:$8 sm:$0x7]
      %327 = vrot.lane.b32.xlu0 %v325, 125
      %v328 = vpop.permute.xlu0 %327
      %v329 = vrot.slane %v328, 1
      %vm330 = vcmask 1022976
      %v331 = vsel %vm330, %v328, %v329
      %v333 = vadd.f32 %v323, %v331
      %s334 = scalar_lea.vmem [#allocation2], 4
      %v335 = vld [vmem:[%s334] ss:$8 sm:$0x7]
      %337 = vrot.lane.b32.xlu0 %v335, 124
      %v338 = vpop.permute.xlu0 %337
      %v339 = vrot.slane %v338, 1
      %vm340 = vcmask 1014784
      %v341 = vsel %vm340, %v338, %v339
      %v343 = vadd.f32 %v333, %v341
      %s344 = scalar_lea.vmem [#allocation2], 5
      %v345 = vld [vmem:[%s344] ss:$8 sm:$0x7]
      %347 = vrot.lane.b32.xlu0 %v345, 123
      %v348 = vpop.permute.xlu0 %347
      %v349 = vrot.slane %v348, 1
      %vm350 = vcmask 1006592
      %v351 = vsel %vm350, %v348, %v349
      %v353 = vadd.f32 %v343, %v351
      %s354 = scalar_lea.vmem [#allocation2], 6
      %v355 = vld [vmem:[%s354] ss:$8 sm:$0x7]
      %357 = vrot.lane.b32.xlu0 %v355, 122
      %v358 = vpop.permute.xlu0 %357
      %v359 = vrot.slane %v358, 1
      %vm360 = vcmask 998400
      %v361 = vsel %vm360, %v358, %v359
      %v363 = vadd.f32 %v353, %v361
      %s364 = scalar_lea.vmem [#allocation2], 7
      %v365 = vld [vmem:[%s364] ss:$8 sm:$0x7]
      %367 = vrot.lane.b32.xlu0 %v365, 121
      %v368 = vpop.permute.xlu0 %367
      %v369 = vrot.slane %v368, 1
      %vm370 = vcmask 990208
      %v371 = vsel %vm370, %v368, %v369
      %v373 = vadd.f32 %v363, %v371
      %s374 = scalar_lea.vmem [#allocation2], 24
      %v375 = vld [vmem:[%s374] ss:$8 sm:$0x7]
      %377 = vrot.lane.b32.xlu0 %v375, 112
      %v378 = vpop.permute.xlu0 %377
      %v379 = vrot.slane %v378, 1
      %vm380 = vcmask 916480
      %v381 = vsel %vm380, %v378, %v379
      %v383 = vadd.f32 %v373, %v381
      %s384 = scalar_lea.vmem [#allocation2], 25
      %v385 = vld [vmem:[%s384] ss:$8 sm:$0x7]
      %387 = vrot.lane.b32.xlu0 %v385, 111
      %v388 = vpop.permute.xlu0 %387
      %v389 = vrot.slane %v388, 1
      %vm390 = vcmask 908288
      %v391 = vsel %vm390, %v388, %v389
      %v393 = vadd.f32 %v383, %v391
      %s394 = scalar_lea.vmem [#allocation2], 26
      %v395 = vld [vmem:[%s394] ss:$8 sm:$0x7]
      %397 = vrot.lane.b32.xlu0 %v395, 110
      %v398 = vpop.permute.xlu0 %397
      %v399 = vrot.slane %v398, 1
      %vm400 = vcmask 900096
      %v401 = vsel %vm400, %v398, %v399
      %v403 = vadd.f32 %v393, %v401
      %s404 = scalar_lea.vmem [#allocation2], 27
      %v405 = vld [vmem:[%s404] ss:$8 sm:$0x7]
      %407 = vrot.lane.b32.xlu0 %v405, 109
      %v408 = vpop.permute.xlu0 %407
      %v409 = vrot.slane %v408, 1
      %vm410 = vcmask 891904
      %v411 = vsel %vm410, %v408, %v409
      %v413 = vadd.f32 %v403, %v411
      %s414 = scalar_lea.vmem [#allocation2], 28
      %v415 = vld [vmem:[%s414] ss:$8 sm:$0x7]
      %417 = vrot.lane.b32.xlu0 %v415, 108
      %v418 = vpop.permute.xlu0 %417
      %v419 = vrot.slane %v418, 1
      %vm420 = vcmask 883712
      %v421 = vsel %vm420, %v418, %v419
      %v423 = vadd.f32 %v413, %v421
      %s424 = scalar_lea.vmem [#allocation2], 29
      %v425 = vld [vmem:[%s424] ss:$8 sm:$0x7]
      %427 = vrot.lane.b32.xlu0 %v425, 107
      %v428 = vpop.permute.xlu0 %427
      %v429 = vrot.slane %v428, 1
      %vm430 = vcmask 875520
      %v431 = vsel %vm430, %v428, %v429
      %v433 = vadd.f32 %v423, %v431
      %s434 = scalar_lea.vmem [#allocation2], 30
      %v435 = vld [vmem:[%s434] ss:$8 sm:$0x7]
      %437 = vrot.lane.b32.xlu0 %v435, 106
      %v438 = vpop.permute.xlu0 %437
      %v439 = vrot.slane %v438, 1
      %vm440 = vcmask 867328
      %v441 = vsel %vm440, %v438, %v439
      %v443 = vadd.f32 %v433, %v441
      %s444 = scalar_lea.vmem [#allocation2], 31
      %v445 = vld [vmem:[%s444] ss:$8 sm:$0x7]
      %447 = vrot.lane.b32.xlu0 %v445, 105
      %v448 = vpop.permute.xlu0 %447
      %v449 = vrot.slane %v448, 1
      %vm450 = vcmask 859136
      %v451 = vsel %vm450, %v448, %v449
      %v453 = vadd.f32 %v443, %v451
      %s454 = scalar_lea.vmem [#allocation2], 48
      %v455 = vld [vmem:[%s454] ss:$8 sm:$0x7]
      %457 = vrot.lane.b32.xlu0 %v455, 96
      %v458 = vpop.permute.xlu0 %457
      %v459 = vrot.slane %v458, 1
      %vm460 = vcmask 785408
      %v461 = vsel %vm460, %v458, %v459
      %v463 = vadd.f32 %v453, %v461
      %s464 = scalar_lea.vmem [#allocation2], 49
      %v465 = vld [vmem:[%s464] ss:$8 sm:$0x7]
      %467 = vrot.lane.b32.xlu0 %v465, 95
      %v468 = vpop.permute.xlu0 %467
      %v469 = vrot.slane %v468, 1
      %vm470 = vcmask 777216
      %v471 = vsel %vm470, %v468, %v469
      %v473 = vadd.f32 %v463, %v471
      %s474 = scalar_lea.vmem [#allocation2], 50
      %v475 = vld [vmem:[%s474] ss:$8 sm:$0x7]
      %477 = vrot.lane.b32.xlu0 %v475, 94
      %v478 = vpop.permute.xlu0 %477
      %v479 = vrot.slane %v478, 1
      %vm480 = vcmask 769024
      %v481 = vsel %vm480, %v478, %v479
      %v483 = vadd.f32 %v473, %v481
      %s484 = scalar_lea.vmem [#allocation2], 51
      %v485 = vld [vmem:[%s484] ss:$8 sm:$0x7]
      %487 = vrot.lane.b32.xlu0 %v485, 93
      %v488 = vpop.permute.xlu0 %487
      %v489 = vrot.slane %v488, 1
      %vm490 = vcmask 760832
      %v491 = vsel %vm490, %v488, %v489
      %v493 = vadd.f32 %v483, %v491
      %s494 = scalar_lea.vmem [#allocation2], 52
      %v495 = vld [vmem:[%s494] ss:$8 sm:$0x7]
      %497 = vrot.lane.b32.xlu0 %v495, 92
      %v498 = vpop.permute.xlu0 %497
      %v499 = vrot.slane %v498, 1
      %vm500 = vcmask 752640
      %v501 = vsel %vm500, %v498, %v499
      %v503 = vadd.f32 %v493, %v501
      %s504 = scalar_lea.vmem [#allocation2], 53
      %v505 = vld [vmem:[%s504] ss:$8 sm:$0x7]
      %507 = vrot.lane.b32.xlu0 %v505, 91
      %v508 = vpop.permute.xlu0 %507
      %v509 = vrot.slane %v508, 1
      %vm510 = vcmask 744448
      %v511 = vsel %vm510, %v508, %v509
      %v513 = vadd.f32 %v503, %v511
      %s514 = scalar_lea.vmem [#allocation2], 54
      %v515 = vld [vmem:[%s514] ss:$8 sm:$0x7]
      %517 = vrot.lane.b32.xlu0 %v515, 90
      %v518 = vpop.permute.xlu0 %517
      %v519 = vrot.slane %v518, 1
      %vm520 = vcmask 736256
      %v521 = vsel %vm520, %v518, %v519
      %v523 = vadd.f32 %v513, %v521
      %s524 = scalar_lea.vmem [#allocation2], 55
      %v525 = vld [vmem:[%s524] ss:$8 sm:$0x7]
      %527 = vrot.lane.b32.xlu0 %v525, 89
      %v528 = vpop.permute.xlu0 %527
      %v529 = vrot.slane %v528, 1
      %vm530 = vcmask 728064
      %v531 = vsel %vm530, %v528, %v529
      %v533 = vadd.f32 %v523, %v531
      %s534 = scalar_lea.vmem [#allocation2], 72
      %v535 = vld [vmem:[%s534] ss:$8 sm:$0x7]
      %537 = vrot.lane.b32.xlu0 %v535, 80
      %v538 = vpop.permute.xlu0 %537
      %v539 = vrot.slane %v538, 1
      %vm540 = vcmask 654336
      %v541 = vsel %vm540, %v538, %v539
      %v543 = vadd.f32 %v533, %v541
      %s544 = scalar_lea.vmem [#allocation2], 73
      %v545 = vld [vmem:[%s544] ss:$8 sm:$0x7]
      %547 = vrot.lane.b32.xlu0 %v545, 79
      %v548 = vpop.permute.xlu0 %547
      %v549 = vrot.slane %v548, 1
      %vm550 = vcmask 646144
      %v551 = vsel %vm550, %v548, %v549
      %v553 = vadd.f32 %v543, %v551
      %s554 = scalar_lea.vmem [#allocation2], 74
      %v555 = vld [vmem:[%s554] ss:$8 sm:$0x7]
      %557 = vrot.lane.b32.xlu0 %v555, 78
      %v558 = vpop.permute.xlu0 %557
      %v559 = vrot.slane %v558, 1
      %vm560 = vcmask 637952
      %v561 = vsel %vm560, %v558, %v559
      %v563 = vadd.f32 %v553, %v561
      %s564 = scalar_lea.vmem [#allocation2], 75
      %v565 = vld [vmem:[%s564] ss:$8 sm:$0x7]
      %567 = vrot.lane.b32.xlu0 %v565, 77
      %v568 = vpop.permute.xlu0 %567
      %v569 = vrot.slane %v568, 1
      %vm570 = vcmask 629760
      %v571 = vsel %vm570, %v568, %v569
      %v573 = vadd.f32 %v563, %v571
      %s574 = scalar_lea.vmem [#allocation2], 76
      %v575 = vld [vmem:[%s574] ss:$8 sm:$0x7]
      %577 = vrot.lane.b32.xlu0 %v575, 76
      %v578 = vpop.permute.xlu0 %577
      %v579 = vrot.slane %v578, 1
      %vm580 = vcmask 621568
      %v581 = vsel %vm580, %v578, %v579
      %v583 = vadd.f32 %v573, %v581
      %s584 = scalar_lea.vmem [#allocation2], 77
      %v585 = vld [vmem:[%s584] ss:$8 sm:$0x7]
      %587 = vrot.lane.b32.xlu0 %v585, 75
      %v588 = vpop.permute.xlu0 %587
      %v589 = vrot.slane %v588, 1
      %vm590 = vcmask 613376
      %v591 = vsel %vm590, %v588, %v589
      %v593 = vadd.f32 %v583, %v591
      %s594 = scalar_lea.vmem [#allocation2], 78
      %v595 = vld [vmem:[%s594] ss:$8 sm:$0x7]
      %597 = vrot.lane.b32.xlu0 %v595, 74
      %v598 = vpop.permute.xlu0 %597
      %v599 = vrot.slane %v598, 1
      %vm600 = vcmask 605184
      %v601 = vsel %vm600, %v598, %v599
      %v603 = vadd.f32 %v593, %v601
      %s604 = scalar_lea.vmem [#allocation2], 79
      %v605 = vld [vmem:[%s604] ss:$8 sm:$0x7]
      %607 = vrot.lane.b32.xlu0 %v605, 73
      %v608 = vpop.permute.xlu0 %607
      %v609 = vrot.slane %v608, 1
      %vm610 = vcmask 596992
      %v611 = vsel %vm610, %v608, %v609
      %v613 = vadd.f32 %v603, %v611
      %s614 = scalar_lea.vmem [#allocation2], 96
      %v615 = vld [vmem:[%s614] ss:$8 sm:$0x7]
      %617 = vrot.lane.b32.xlu0 %v615, 64
      %v618 = vpop.permute.xlu0 %617
      %v619 = vrot.slane %v618, 1
      %vm620 = vcmask 523264
      %v621 = vsel %vm620, %v618, %v619
      %v623 = vadd.f32 %v613, %v621
      %s624 = scalar_lea.vmem [#allocation2], 97
      %v625 = vld [vmem:[%s624] ss:$8 sm:$0x7]
      %627 = vrot.lane.b32.xlu0 %v625, 63
      %v628 = vpop.permute.xlu0 %627
      %v629 = vrot.slane %v628, 1
      %vm630 = vcmask 515072
      %v631 = vsel %vm630, %v628, %v629
      %v633 = vadd.f32 %v623, %v631
      %s634 = scalar_lea.vmem [#allocation2], 98
      %v635 = vld [vmem:[%s634] ss:$8 sm:$0x7]
      %637 = vrot.lane.b32.xlu0 %v635, 62
      %v638 = vpop.permute.xlu0 %637
      %v639 = vrot.slane %v638, 1
      %vm640 = vcmask 506880
      %v641 = vsel %vm640, %v638, %v639
      %v643 = vadd.f32 %v633, %v641
      %s644 = scalar_lea.vmem [#allocation2], 99
      %v645 = vld [vmem:[%s644] ss:$8 sm:$0x7]
      %647 = vrot.lane.b32.xlu0 %v645, 61
      %v648 = vpop.permute.xlu0 %647
      %v649 = vrot.slane %v648, 1
      %vm650 = vcmask 498688
      %v651 = vsel %vm650, %v648, %v649
      %v653 = vadd.f32 %v643, %v651
      %s654 = scalar_lea.vmem [#allocation2], 100
      %v655 = vld [vmem:[%s654] ss:$8 sm:$0x7]
      %657 = vrot.lane.b32.xlu0 %v655, 60
      %v658 = vpop.permute.xlu0 %657
      %v659 = vrot.slane %v658, 1
      %vm660 = vcmask 490496
      %v661 = vsel %vm660, %v658, %v659
      %v663 = vadd.f32 %v653, %v661
      %s664 = scalar_lea.vmem [#allocation2], 101
      %v665 = vld [vmem:[%s664] ss:$8 sm:$0x7]
      %667 = vrot.lane.b32.xlu0 %v665, 59
      %v668 = vpop.permute.xlu0 %667
      %v669 = vrot.slane %v668, 1
      %vm670 = vcmask 482304
      %v671 = vsel %vm670, %v668, %v669
      %v673 = vadd.f32 %v663, %v671
      %s674 = scalar_lea.vmem [#allocation2], 102
      %v675 = vld [vmem:[%s674] ss:$8 sm:$0x7]
      %677 = vrot.lane.b32.xlu0 %v675, 58
      %v678 = vpop.permute.xlu0 %677
      %v679 = vrot.slane %v678, 1
      %vm680 = vcmask 474112
      %v681 = vsel %vm680, %v678, %v679
      %v683 = vadd.f32 %v673, %v681
      %s684 = scalar_lea.vmem [#allocation2], 103
      %v685 = vld [vmem:[%s684] ss:$8 sm:$0x7]
      %687 = vrot.lane.b32.xlu0 %v685, 57
      %v688 = vpop.permute.xlu0 %687
      %v689 = vrot.slane %v688, 1
      %vm690 = vcmask 465920
      %v691 = vsel %vm690, %v688, %v689
      %v693 = vadd.f32 %v683, %v691
      %s694 = scalar_lea.vmem [#allocation2], 120
      %v695 = vld [vmem:[%s694] ss:$8 sm:$0x7]
      %697 = vrot.lane.b32.xlu0 %v695, 48
      %v698 = vpop.permute.xlu0 %697
      %v699 = vrot.slane %v698, 1
      %vm700 = vcmask 392192
      %v701 = vsel %vm700, %v698, %v699
      %v703 = vadd.f32 %v693, %v701
      %s704 = scalar_lea.vmem [#allocation2], 121
      %v705 = vld [vmem:[%s704] ss:$8 sm:$0x7]
      %707 = vrot.lane.b32.xlu0 %v705, 47
      %v708 = vpop.permute.xlu0 %707
      %v709 = vrot.slane %v708, 1
      %vm710 = vcmask 384000
      %v711 = vsel %vm710, %v708, %v709
      %v713 = vadd.f32 %v703, %v711
      %s714 = scalar_lea.vmem [#allocation2], 122
      %v715 = vld [vmem:[%s714] ss:$8 sm:$0x7]
      %717 = vrot.lane.b32.xlu0 %v715, 46
      %v718 = vpop.permute.xlu0 %717
      %v719 = vrot.slane %v718, 1
      %vm720 = vcmask 375808
      %v721 = vsel %vm720, %v718, %v719
      %v723 = vadd.f32 %v713, %v721
      %s724 = scalar_lea.vmem [#allocation2], 123
      %v725 = vld [vmem:[%s724] ss:$8 sm:$0x7]
      %727 = vrot.lane.b32.xlu0 %v725, 45
      %v728 = vpop.permute.xlu0 %727
      %v729 = vrot.slane %v728, 1
      %vm730 = vcmask 367616
      %v731 = vsel %vm730, %v728, %v729
      %v733 = vadd.f32 %v723, %v731
      %s734 = scalar_lea.vmem [#allocation2], 124
      %v735 = vld [vmem:[%s734] ss:$8 sm:$0x7]
      %737 = vrot.lane.b32.xlu0 %v735, 44
      %v738 = vpop.permute.xlu0 %737
      %v739 = vrot.slane %v738, 1
      %vm740 = vcmask 359424
      %v741 = vsel %vm740, %v738, %v739
      %v743 = vadd.f32 %v733, %v741
      %s744 = scalar_lea.vmem [#allocation2], 125
      %v745 = vld [vmem:[%s744] ss:$8 sm:$0x7]
      %747 = vrot.lane.b32.xlu0 %v745, 43
      %v748 = vpop.permute.xlu0 %747
      %v749 = vrot.slane %v748, 1
      %vm750 = vcmask 351232
      %v751 = vsel %vm750, %v748, %v749
      %v753 = vadd.f32 %v743, %v751
      %s754 = scalar_lea.vmem [#allocation2], 126
      %v755 = vld [vmem:[%s754] ss:$8 sm:$0x7]
      %757 = vrot.lane.b32.xlu0 %v755, 42
      %v758 = vpop.permute.xlu0 %757
      %v759 = vrot.slane %v758, 1
      %vm760 = vcmask 343040
      %v761 = vsel %vm760, %v758, %v759
      %v763 = vadd.f32 %v753, %v761
      %s764 = scalar_lea.vmem [#allocation2], 127
      %v765 = vld [vmem:[%s764] ss:$8 sm:$0x7]
      %767 = vrot.lane.b32.xlu0 %v765, 41
      %v768 = vpop.permute.xlu0 %767
      %v769 = vrot.slane %v768, 1
      %vm770 = vcmask 334848
      %v771 = vsel %vm770, %v768, %v769
      %v773 = vadd.f32 %v763, %v771
      %s774 = scalar_lea.vmem [#allocation2], 144
      %v775 = vld [vmem:[%s774] ss:$8 sm:$0x7]
      %777 = vrot.lane.b32.xlu0 %v775, 32
      %v778 = vpop.permute.xlu0 %777
      %v779 = vrot.slane %v778, 1
      %vm780 = vcmask 261120
      %v781 = vsel %vm780, %v778, %v779
      %v783 = vadd.f32 %v773, %v781
      %s784 = scalar_lea.vmem [#allocation2], 145
      %v785 = vld [vmem:[%s784] ss:$8 sm:$0x7]
      %787 = vrot.lane.b32.xlu0 %v785, 31
      %v788 = vpop.permute.xlu0 %787
      %v789 = vrot.slane %v788, 1
      %vm790 = vcmask 252928
      %v791 = vsel %vm790, %v788, %v789
      %v793 = vadd.f32 %v783, %v791
      %s794 = scalar_lea.vmem [#allocation2], 146
      %v795 = vld [vmem:[%s794] ss:$8 sm:$0x7]
      %797 = vrot.lane.b32.xlu0 %v795, 30
      %v798 = vpop.permute.xlu0 %797
      %v799 = vrot.slane %v798, 1
      %vm800 = vcmask 244736
      %v801 = vsel %vm800, %v798, %v799
      %v803 = vadd.f32 %v793, %v801
      %s804 = scalar_lea.vmem [#allocation2], 147
      %v805 = vld [vmem:[%s804] ss:$8 sm:$0x7]
      %807 = vrot.lane.b32.xlu0 %v805, 29
      %v808 = vpop.permute.xlu0 %807
      %v809 = vrot.slane %v808, 1
      %vm810 = vcmask 236544
      %v811 = vsel %vm810, %v808, %v809
      %v813 = vadd.f32 %v803, %v811
      %s814 = scalar_lea.vmem [#allocation2], 148
      %v815 = vld [vmem:[%s814] ss:$8 sm:$0x7]
      %817 = vrot.lane.b32.xlu0 %v815, 28
      %v818 = vpop.permute.xlu0 %817
      %v819 = vrot.slane %v818, 1
      %vm820 = vcmask 228352
      %v821 = vsel %vm820, %v818, %v819
      %v823 = vadd.f32 %v813, %v821
      %s824 = scalar_lea.vmem [#allocation2], 149
      %v825 = vld [vmem:[%s824] ss:$8 sm:$0x7]
      %827 = vrot.lane.b32.xlu0 %v825, 27
      %v828 = vpop.permute.xlu0 %827
      %v829 = vrot.slane %v828, 1
      %vm830 = vcmask 220160
      %v831 = vsel %vm830, %v828, %v829
      %v833 = vadd.f32 %v823, %v831
      %s834 = scalar_lea.vmem [#allocation2], 150
      %v835 = vld [vmem:[%s834] ss:$8 sm:$0x7]
      %837 = vrot.lane.b32.xlu0 %v835, 26
      %v838 = vpop.permute.xlu0 %837
      %v839 = vrot.slane %v838, 1
      %vm840 = vcmask 211968
      %v841 = vsel %vm840, %v838, %v839
      %v843 = vadd.f32 %v833, %v841
      %s844 = scalar_lea.vmem [#allocation2], 151
      %v845 = vld [vmem:[%s844] ss:$8 sm:$0x7]
      %847 = vrot.lane.b32.xlu0 %v845, 25
      %v848 = vpop.permute.xlu0 %847
      %v849 = vrot.slane %v848, 1
      %vm850 = vcmask 203776
      %v851 = vsel %vm850, %v848, %v849
      %v853 = vadd.f32 %v843, %v851
      %s854 = scalar_lea.vmem [#allocation2], 168
      %v855 = vld [vmem:[%s854] ss:$8 sm:$0x7]
      %857 = vrot.lane.b32.xlu0 %v855, 16
      %v858 = vpop.permute.xlu0 %857
      %v859 = vrot.slane %v858, 1
      %vm860 = vcmask 130048
      %v861 = vsel %vm860, %v858, %v859
      %v863 = vadd.f32 %v853, %v861
      %s864 = scalar_lea.vmem [#allocation2], 169
      %v865 = vld [vmem:[%s864] ss:$8 sm:$0x7]
      %867 = vrot.lane.b32.xlu0 %v865, 15
      %v868 = vpop.permute.xlu0 %867
      %v869 = vrot.slane %v868, 1
      %vm870 = vcmask 121856
      %v871 = vsel %vm870, %v868, %v869
      %v873 = vadd.f32 %v863, %v871
      %s874 = scalar_lea.vmem [#allocation2], 170
      %v875 = vld [vmem:[%s874] ss:$8 sm:$0x7]
      %877 = vrot.lane.b32.xlu0 %v875, 14
      %v878 = vpop.permute.xlu0 %877
      %v879 = vrot.slane %v878, 1
      %vm880 = vcmask 113664
      %v881 = vsel %vm880, %v878, %v879
      %v883 = vadd.f32 %v873, %v881
      %s884 = scalar_lea.vmem [#allocation2], 171
      %v885 = vld [vmem:[%s884] ss:$8 sm:$0x7]
      %887 = vrot.lane.b32.xlu0 %v885, 13
      %v888 = vpop.permute.xlu0 %887
      %v889 = vrot.slane %v888, 1
      %vm890 = vcmask 105472
      %v891 = vsel %vm890, %v888, %v889
      %v893 = vadd.f32 %v883, %v891
      %s894 = scalar_lea.vmem [#allocation2], 172
      %v895 = vld [vmem:[%s894] ss:$8 sm:$0x7]
      %897 = vrot.lane.b32.xlu0 %v895, 12
      %v898 = vpop.permute.xlu0 %897
      %v899 = vrot.slane %v898, 1
      %vm900 = vcmask 97280
      %v901 = vsel %vm900, %v898, %v899
      %v903 = vadd.f32 %v893, %v901
      %s904 = scalar_lea.vmem [#allocation2], 173
      %v905 = vld [vmem:[%s904] ss:$8 sm:$0x7]
      %907 = vrot.lane.b32.xlu0 %v905, 11
      %v908 = vpop.permute.xlu0 %907
      %v909 = vrot.slane %v908, 1
      %vm910 = vcmask 89088
      %v911 = vsel %vm910, %v908, %v909
      %v913 = vadd.f32 %v903, %v911
      %s914 = scalar_lea.vmem [#allocation2], 174
      %v915 = vld [vmem:[%s914] ss:$8 sm:$0x7]
      %917 = vrot.lane.b32.xlu0 %v915, 10
      %v918 = vpop.permute.xlu0 %917
      %v919 = vrot.slane %v918, 1
      %vm920 = vcmask 80896
      %v921 = vsel %vm920, %v918, %v919
      %v923 = vadd.f32 %v913, %v921
      %s924 = scalar_lea.vmem [#allocation2], 175
      %v925 = vld [vmem:[%s924] ss:$8 sm:$0x7]
      %927 = vrot.lane.b32.xlu0 %v925, 9
      %v928 = vpop.permute.xlu0 %927
      %v929 = vrot.slane %v928, 1
      %vm930 = vcmask 72704
      %v931 = vsel %vm930, %v928, %v929
      %v933 = vadd.f32 %v923, %v931
      %v934 = vmul.f32 %v933, 0.1
      %v935 = vlaneseq
      %vm936 = vcmp.ge.s32.totalorder %v935, 0
      %vm937 = vcmp.lt.s32.totalorder %v935, 256
      %vm938 = vmand %vm936, %vm937
      %939 = vst.msk [vmem:[%s161] sm:$0x3] %vm938, %v934
      %p940 = scmp.lt.s32.totalorder %s13, 1
      %s941 = scalar_select %p940, %s13, 1
      %s942 = smul.addr %s941, 2
      %s943 = scalar_lea.vmem %s2, %s942
      // Predicated region
      $region33: #{corr_up.1} parent=27 // pred_check
        %p944 = pneg %p83
      $region34: #{corr_up.1} parent=27 // pred_check_branch
        %946 = sbr.rel (%p944) target = $region36
      $region35: #{corr_up.1} parent=27 // pred_region
        _
      $region36: #{corr_up.1} parent=27 // pred_fallthru
        _
    $region28: #{corr_up.1} parent=5 // pred_fallthru
      _
    %p947 = scmp.le.s32.totalorder 2, %s8
    // Predicated region
    $region37: #{corr_up.1} parent=5 // pred_check
      %p948 = pneg %p947
    $region38: #{corr_up.1} parent=5 // pred_check_branch
      %950 = sbr.rel (%p948) target = $region40
    $region39: #{corr_up.1} parent=5 // pred_region
      %s951 = ssub.s32 %s8, 2
      // Predicated region
      $region41: #{corr_up.1} parent=39 // pred_check
        %p952 = pneg %p89
      $region42: #{corr_up.1} parent=39 // pred_check_branch
        %954 = sbr.rel (%p952) target = $region44
      $region43: #{corr_up.1} parent=39 // pred_region
        %p955 = scmp.lt.s32.totalorder %s14, 1
        %s956 = scalar_select %p955, %s14, 1
        %s957 = smul.addr %s956, 2
        %s958 = scalar_lea.vmem %s2, %s957
      $region44: #{corr_up.1} parent=39 // pred_fallthru
        _
    $region40: #{corr_up.1} parent=5 // pred_fallthru
      _
  $region6: #{corr_up.1} parent=0 // loop_footer
    %s12 = sadd.s32 1, %s8
  $region7: #{corr_up.1} parent=0 // loop_footer_branch
    %7 = sbr.rel target = $region3
  $region8: #{corr_up.1} parent=0 // loop_exit
    _

</llo_original>
